<compile_context>
chip_gen: v7x
topology: tpu7x:2x2x1
jax: 0.10.0
libtpu: 0.0.40
codegen_flags: <defaults>
</compile_context>

<pallas_src>
import jax
import jax.numpy as jnp
import numpy as np
from jax.experimental import pallas as pl
from jax.experimental.pallas import tpu as pltpu


def relational_kernel(ball_ref, objlin_ref, w1b_ref, w2_ref, b2_ref,
                      whead_ref, bhead_ref, out_ref):
    """One grid step processes `bb` batch elements: all T timesteps x K objects."""
    bb, T, Eb = ball_ref.shape
    _, K, _, H1 = objlin_ref.shape            # objlin = objects @ W1_obj + b1
    H2 = w2_ref.shape[1]
    D = whead_ref.shape[1] - 1                # fused head = [Wh | Wl]
    mxu_dtype = w2_ref.dtype                  # bf16 by default (f32 optional)

    # Ball half of the split-concat first layer, all bb*T rows in ONE MXU push.
    # The leading-dim merge is done in f32 (8-sublane-aligned regroup, the
    # proven-supported relayout class); the casts around it are trivial VPU work
    # while the bf16-in-HBM input keeps the DMA traffic halved.
    ball2d = (ball_ref[...].astype(jnp.float32)
              .reshape(bb * T, Eb).astype(mxu_dtype))
    ball_part = jnp.dot(ball2d, w1b_ref[...],
                        preferred_element_type=jnp.float32)           # [bb*T, H1]

    # h1 for every (b, k, t) via one broadcast add.  objlin_ref already holds
    # objects @ W1_obj + b1 (hoisted to the wrapper; see module docstring), so
    # no K-sized sublane regrouping is needed in-kernel.
    h1 = jnp.maximum(ball_part.reshape(bb, 1, T, H1) + objlin_ref[...], 0.0)
    h1 = h1.reshape(bb * K * T, H1)                                    # [rows, H1]

    # ONE second-layer matmul for all rows (bf16 operands, f32 accumulation).
    h2 = jnp.maximum(
        jnp.dot(h1.astype(mxu_dtype), w2_ref[...],
                preferred_element_type=jnp.float32) + b2_ref[...], 0.0)  # [rows, H2]

    # ONE fused head matmul: columns [0:D] are h, column D is the logit.
    head = (jnp.dot(h2.astype(mxu_dtype), whead_ref[...],
                    preferred_element_type=jnp.float32)
            + bhead_ref[...])                                          # [rows, D+1]

    h = head[:, :D].reshape(bb, K, T, D)                               # [bb, K, T, D]
    logit = head[:, D:].reshape(bb, K, T, 1)                           # [bb, K, T, 1]

    # Softmax over the K objects (axis=1): leading-axis reductions are plain
    # VPU combines; the reciprocal goes to the EUP slot (~free).
    m = jnp.max(logit, axis=1, keepdims=True)                          # [bb, 1, T, 1]
    e = jnp.exp(logit - m)
    denom = jnp.sum(e, axis=1, keepdims=True)
    scores = e * pl.reciprocal(denom, approx=True)                     # [bb, K, T, 1]

    # Weighted sum over K: single lane-broadcast + leading-axis reduce.
    out = jnp.sum(scores * h, axis=1)                                  # [bb, T, D]

    # NOTE / deferred (see review): the softmax above runs on lane-width-1
    # vregs and the store below is a D=16-lane masked store.  Making both
    # lane-dense (softmax on [bb,K,T] with T in the lane axis; a [bb, T*D]
    # output slab; ultimately a fully transposed rows-in-lane orientation)
    # requires lane-changing Mosaic reshapes that are not guaranteed to lower
    # at these shapes, so they are left for the transposed-orientation rewrite.
    out_ref[...] = out.astype(out_ref.dtype)


def _tpu_hw_info():
    """Return (TensorCores per chip, VMEM bytes); conservative if unknown."""
    num_tc, vmem_bytes = 2, 64 << 20                     # v7x-like conservative default
    try:
        kind = jax.devices()[0].device_kind.lower()
    except Exception:
        kind = ""
    if "v7" in kind:
        num_tc, vmem_bytes = 2, 64 << 20                 # 2 TCs, 64 MiB VMEM/TC
    elif any(s in kind for s in ("v5 lite", "v5e", "v5lite", "v6 lite", "v6e", "v6")):
        num_tc, vmem_bytes = 1, 128 << 20                # single-TC v5e / v6e
    elif any(s in kind for s in ("v5p", "v5", "v4")):
        num_tc, vmem_bytes = 2, 128 << 20                # megacore generations
    try:  # refine VMEM capacity if the query is available
        vmem_bytes = int(pltpu.get_tpu_info().vmem_capacity_bytes)
    except Exception:
        pass
    return num_tc, vmem_bytes


def _choose_batch_block(B, K, T, *, num_tensorcores, max_rows):
    """Largest batch block bb that divides B, respects the per-step row budget
    and the per-generation grid rule (grid=(1,) is fine on single-TC chips;
    on 2-TC v7x keep the step count an even multiple of the core count)."""
    # bb > 1 merges several batch elements' T-sublane slices inside the kernel;
    # keep that to the 8-sublane-aligned case, else fall back to the
    # layout-trivial bb = 1 path.
    if T % 8 != 0:
        return 1
    rows_per_batch = max(1, K * T)
    cap = max(1, max_rows // rows_per_batch)
    divisors = [d for d in range(1, B + 1) if B % d == 0 and d <= cap] or [1]
    if num_tensorcores <= 1:
        return max(divisors)                              # grid=(1,) when it fits
    even = [d for d in divisors if (B // d) % num_tensorcores == 0]
    if even:
        return max(even)
    multi = [d for d in divisors if (B // d) >= num_tensorcores]
    return max(multi) if multi else max(divisors)


def relational_layer(objects, ball, params, *, batch_block=None,
                     compute_dtype=jnp.bfloat16):
    """objects: [B, K, Eo], ball: [B, T, Eb] -> [B, T, D]."""
    B, T, Eb = ball.shape
    _, K, Eo = objects.shape
    out_dtype = ball.dtype

    w1b, w1o, b1 = params["w1b"], params["w1o"], params["b1"]
    w2, b2 = params["w2"], params["b2"]
    wh, bh, wl, bl = params["wh"], params["bh"], params["wl"], params["bl"]
    H1, H2, D = w1b.shape[1], w2.shape[1], wh.shape[1]

    # Fused output head: [Wh | Wl] -> one [H2, D+1] matmul; logit = last column.
    whead = jnp.concatenate([wh, wl], axis=1)
    bhead = jnp.concatenate([bh, bl], axis=1).astype(jnp.float32)

    # Object half of the split-concat first layer (+ b1), hoisted: tiny (B*K
    # rows), T-independent, and it removes the K%8-dependent reshape from the
    # kernel.  Kept in f32 so the first-layer accumulation stays exact.
    obj_lin = (objects.astype(jnp.float32) @ w1o.astype(jnp.float32)
               + b1.astype(jnp.float32)[0]).reshape(B, K, 1, H1)

    # bf16 matmul operands (f32 accumulation via preferred_element_type inside
    # the kernel).  Post-matmul VPU/EUP math is f32 (v5e has no bf16 VPU/EUP).
    ball_c = ball.astype(compute_dtype)
    w1b_c = w1b.astype(compute_dtype)
    w2_c = w2.astype(compute_dtype)
    whead_c = whead.astype(compute_dtype)
    b2_c = b2.astype(jnp.float32)

    num_tc, vmem_bytes = _tpu_hw_info()
    # Explicit scoped-VMEM limit (v5e defaults to 16 MiB) with headroom below
    # the physical capacity: 48 MiB on v7x (64 MiB), 96 MiB on v5e/v6e (128 MiB).
    vmem_limit = int(min(vmem_bytes * 3 // 4, 100 << 20))
    # Row budget per grid step: ~2 KiB/row of lane-padded f32 intermediates at
    # peak liveness; reserve half the scoped limit for them (rest: IO double
    # buffers + slack).  => ~12K rows/step on v7x, ~24K on v5e/v6e — the
    # primary knob that amortizes the ~0.35 us per-step pipeline overhead.
    max_rows = max(K * T, (vmem_limit // 2) // 2048)

    if batch_block is None:
        batch_block = _choose_batch_block(B, K, T, num_tensorcores=num_tc,
                                          max_rows=max_rows)
    assert B % batch_block == 0, "batch_block must divide B"
    bb = batch_block
    grid = (B // bb,)

    def const_spec(shape):
        return pl.BlockSpec(shape, lambda b, _n=len(shape): (0,) * _n)

    return pl.pallas_call(
        relational_kernel,
        out_shape=jax.ShapeDtypeStruct((B, T, D), out_dtype),
        grid=grid,
        in_specs=[
            pl.BlockSpec((bb, T, Eb), lambda b: (b, 0, 0)),        # ball (bf16)
            pl.BlockSpec((bb, K, 1, H1), lambda b: (b, 0, 0, 0)),  # objects@W1o + b1
            const_spec((Eb, H1)),        # W1 (ball part)
            const_spec((H1, H2)),        # W2
            const_spec((1, H2)),         # b2
            const_spec((H2, D + 1)),     # fused [Wh | Wl]
            const_spec((1, D + 1)),      # fused [bh | bl]
        ],
        out_specs=pl.BlockSpec((bb, T, D), lambda b: (b, 0, 0)),
        compiler_params=pltpu.CompilerParams(
            dimension_semantics=("parallel",),
            vmem_limit_bytes=vmem_limit),
    )(ball_c, obj_lin, w1b_c, w2_c, b2_c, whead_c, bhead)


def relational_layer_ref(objects, ball, params):
    """Pure-JAX reference matching the PyTorch forward (all f32)."""
    B, T, Eb = ball.shape
    _, K, Eo = objects.shape
    ball_e = jnp.broadcast_to(ball[:, :, None, :], (B, T, K, Eb))
    obj_e = jnp.broadcast_to(objects[:, None, :, :], (B, T, K, Eo))
    x = jnp.concatenate([ball_e, obj_e], axis=-1)                 # [B,T,K,Eb+Eo]
    w1 = jnp.concatenate([params["w1b"], params["w1o"]], axis=0)  # [Eb+Eo, H1]
    h1 = jax.nn.relu(x @ w1 + params["b1"][0])
    h2 = jax.nn.relu(h1 @ params["w2"] + params["b2"][0])
    h = h2 @ params["wh"] + params["bh"][0]                       # [B,T,K,D]
    logit = h2 @ params["wl"] + params["bl"][0]                   # [B,T,K,1]
    scores = jax.nn.softmax(logit[..., 0], axis=-1)               # [B,T,K]
    return jnp.sum(scores[..., None] * h, axis=2)                 # [B,T,D]


def init_params(key, object_embed_size, ball_embed_size, output_size,
                hidden=(24, 24), dtype=jnp.float32):
    H1, H2 = hidden
    ks = jax.random.split(key, 9)
    scale = 0.1
    return {
        "w1b": scale * jax.random.normal(ks[0], (ball_embed_size, H1), dtype),
        "w1o": scale * jax.random.normal(ks[1], (object_embed_size, H1), dtype),
        "b1":  scale * jax.random.normal(ks[2], (1, H1), dtype),
        "w2":  scale * jax.random.normal(ks[3], (H1, H2), dtype),
        "b2":  scale * jax.random.normal(ks[4], (1, H2), dtype),
        "wh":  scale * jax.random.normal(ks[5], (H2, output_size), dtype),
        "bh":  scale * jax.random.normal(ks[6], (1, output_size), dtype),
        "wl":  scale * jax.random.normal(ks[7], (H2, 1), dtype),
        "bl":  scale * jax.random.normal(ks[8], (1, 1), dtype),
    }


if __name__ == "__main__":
    B, T, K = 2, 8, 4
    ball_embed_size, object_embed_size, output_size = 16, 8, 16

    key = jax.random.PRNGKey(0)
    k_params, k_ball, k_obj = jax.random.split(key, 3)
    params = init_params(k_params, object_embed_size, ball_embed_size, output_size)
    ball = jax.random.normal(k_ball, (B, T, ball_embed_size), jnp.float32)
    objects = jax.random.normal(k_obj, (B, K, object_embed_size), jnp.float32)

    ref = jax.block_until_ready(relational_layer_ref(objects, ball, params))

    # f32-MXU path: only approximation is the EUP approximate reciprocal in the
    # softmax denominator (accepted in review; ~1e-3 relative on the weights).
    out_f32 = jax.block_until_ready(
        relational_layer(objects, ball, params, compute_dtype=jnp.float32))
    assert out_f32.shape == (B, T, output_size)
    np.testing.assert_allclose(np.asarray(out_f32), np.asarray(ref),
                               rtol=5e-3, atol=5e-3)

    # Default bf16-MXU path (f32 accumulation + f32 VPU math); tolerance covers
    # bf16 rounding of the matmul operands.
    out_bf16 = jax.block_until_ready(relational_layer(objects, ball, params))
    assert out_bf16.shape == (B, T, output_size)
    np.testing.assert_allclose(np.asarray(out_bf16), np.asarray(ref),
                               rtol=2e-2, atol=2e-2)

    # Multi-step grid path (what a 2-TensorCore v7x picks for this B).
    out_grid2 = jax.block_until_ready(
        relational_layer(objects, ball, params, batch_block=1))
    np.testing.assert_allclose(np.asarray(out_grid2), np.asarray(ref),
                               rtol=2e-2, atol=2e-2)

    print("KERNEL_OK")
</pallas_src>

<mosaic_0001>
module attributes {stable_mosaic.version = 11 : i64} {
  func.func @relational_kernel(%arg0: i32, %arg1: memref<1x8x16xf32, #tpu.memory_space<vmem>>, %arg2: memref<1x4x1x24xf32, #tpu.memory_space<vmem>>, %arg3: memref<16x24xf32, #tpu.memory_space<vmem>>, %arg4: memref<24x24xf32, #tpu.memory_space<vmem>>, %arg5: memref<1x24xf32, #tpu.memory_space<vmem>>, %arg6: memref<24x17xf32, #tpu.memory_space<vmem>>, %arg7: memref<1x17xf32, #tpu.memory_space<vmem>>, %arg8: memref<1x8x16xf32, #tpu.memory_space<vmem>>) attributes {dimension_semantics = [#tpu.dimension_semantics<parallel>], iteration_bounds = array<i64: 2>, scalar_prefetch = 0 : i64, scratch_operands = 0 : i64, tpu.core_type = #tpu.core_type<tc>, window_params = [{transform_indices = @transform_0, window_bounds = array<i64: 1, 8, 16>}, {transform_indices = @transform_1, window_bounds = array<i64: 1, 4, 1, 24>}, {pipeline_mode = #tpu.pipeline_mode<synchronous>, transform_indices = @transform_2, window_bounds = array<i64: 16, 24>}, {pipeline_mode = #tpu.pipeline_mode<synchronous>, transform_indices = @transform_3, window_bounds = array<i64: 24, 24>}, {pipeline_mode = #tpu.pipeline_mode<synchronous>, transform_indices = @transform_4, window_bounds = array<i64: 1, 24>}, {pipeline_mode = #tpu.pipeline_mode<synchronous>, transform_indices = @transform_5, window_bounds = array<i64: 24, 17>}, {pipeline_mode = #tpu.pipeline_mode<synchronous>, transform_indices = @transform_6, window_bounds = array<i64: 1, 17>}, {transform_indices = @transform_7, window_bounds = array<i64: 1, 8, 16>}]} {
    %c0 = arith.constant 0 : index
    %c0_0 = arith.constant 0 : index
    %c0_1 = arith.constant 0 : index
    %0 = vector.load %arg1[%c0, %c0_0, %c0_1] : memref<1x8x16xf32, #tpu.memory_space<vmem>>, vector<1x8x16xf32>
    %1 = vector.shape_cast %0 : vector<1x8x16xf32> to vector<8x16xf32>
    %c0_2 = arith.constant 0 : index
    %c0_3 = arith.constant 0 : index
    %2 = vector.load %arg3[%c0_2, %c0_3] : memref<16x24xf32, #tpu.memory_space<vmem>>, vector<16x24xf32>
    %cst = arith.constant dense<0.000000e+00> : vector<8x24xf32>
    %3 = tpu.matmul %1, %2, %cst {dimension_numbers = #tpu.dot_dimension_numbers<[1], [0], [0], [1], [0, 0, 1, 1], [], []>} : vector<8x16xf32>, vector<16x24xf32>, vector<8x24xf32> -> vector<8x24xf32>
    %4 = vector.shape_cast %3 : vector<8x24xf32> to vector<1x1x8x24xf32>
    %c0_4 = arith.constant 0 : index
    %c0_5 = arith.constant 0 : index
    %c0_6 = arith.constant 0 : index
    %c0_7 = arith.constant 0 : index
    %5 = vector.load %arg2[%c0_4, %c0_5, %c0_6, %c0_7] : memref<1x4x1x24xf32, #tpu.memory_space<vmem>>, vector<1x4x1x24xf32>
    %6 = vector.broadcast %4 : vector<1x1x8x24xf32> to vector<1x4x8x24xf32>
    %7 = vector.broadcast %5 : vector<1x4x1x24xf32> to vector<1x4x8x24xf32>
    %8 = arith.addf %6, %7 : vector<1x4x8x24xf32>
    %cst_8 = arith.constant 0.000000e+00 : f32
    %9 = vector.broadcast %cst_8 : f32 to vector<1x4x8x24xf32>
    %10 = arith.maximumf %8, %9 : vector<1x4x8x24xf32>
    %11 = vector.shape_cast %10 : vector<1x4x8x24xf32> to vector<32x24xf32>
    %c0_9 = arith.constant 0 : index
    %c0_10 = arith.constant 0 : index
    %12 = vector.load %arg4[%c0_9, %c0_10] : memref<24x24xf32, #tpu.memory_space<vmem>>, vector<24x24xf32>
    %cst_11 = arith.constant dense<0.000000e+00> : vector<32x24xf32>
    %13 = tpu.matmul %11, %12, %cst_11 {dimension_numbers = #tpu.dot_dimension_numbers<[1], [0], [0], [1], [0, 0, 1, 1], [], []>} : vector<32x24xf32>, vector<24x24xf32>, vector<32x24xf32> -> vector<32x24xf32>
    %c0_12 = arith.constant 0 : index
    %c0_13 = arith.constant 0 : index
    %14 = vector.load %arg5[%c0_12, %c0_13] : memref<1x24xf32, #tpu.memory_space<vmem>>, vector<1x24xf32>
    %15 = vector.broadcast %14 : vector<1x24xf32> to vector<32x24xf32>
    %16 = arith.addf %13, %15 : vector<32x24xf32>
    %cst_14 = arith.constant 0.000000e+00 : f32
    %17 = vector.broadcast %cst_14 : f32 to vector<32x24xf32>
    %18 = arith.maximumf %16, %17 : vector<32x24xf32>
    %c0_15 = arith.constant 0 : index
    %c0_16 = arith.constant 0 : index
    %19 = vector.load %arg6[%c0_15, %c0_16] : memref<24x17xf32, #tpu.memory_space<vmem>>, vector<24x17xf32>
    %cst_17 = arith.constant dense<0.000000e+00> : vector<32x17xf32>
    %20 = tpu.matmul %18, %19, %cst_17 {dimension_numbers = #tpu.dot_dimension_numbers<[1], [0], [0], [1], [0, 0, 1, 1], [], []>} : vector<32x24xf32>, vector<24x17xf32>, vector<32x17xf32> -> vector<32x17xf32>
    %c0_18 = arith.constant 0 : index
    %c0_19 = arith.constant 0 : index
    %21 = vector.load %arg7[%c0_18, %c0_19] : memref<1x17xf32, #tpu.memory_space<vmem>>, vector<1x17xf32>
    %22 = vector.broadcast %21 : vector<1x17xf32> to vector<32x17xf32>
    %23 = arith.addf %20, %22 : vector<32x17xf32>
    %24 = vector.extract_strided_slice %23 {offsets = [0, 0], sizes = [32, 16], strides = [1, 1]} : vector<32x17xf32> to vector<32x16xf32>
    %25 = vector.shape_cast %24 : vector<32x16xf32> to vector<1x4x8x16xf32>
    %26 = vector.extract_strided_slice %23 {offsets = [0, 16], sizes = [32, 1], strides = [1, 1]} : vector<32x17xf32> to vector<32x1xf32>
    %27 = vector.shape_cast %26 : vector<32x1xf32> to vector<1x4x8x1xf32>
    %cst_20 = arith.constant dense<0xFF800000> : vector<1x8x1xf32>
    %28 = vector.multi_reduction <maximumf>, %27, %cst_20 [1] : vector<1x4x8x1xf32> to vector<1x8x1xf32>
    %29 = vector.shape_cast %28 : vector<1x8x1xf32> to vector<1x1x8x1xf32>
    %30 = vector.broadcast %29 : vector<1x1x8x1xf32> to vector<1x4x8x1xf32>
    %31 = arith.subf %27, %30 : vector<1x4x8x1xf32>
    %32 = math.exp %31 : vector<1x4x8x1xf32>
    %cst_21 = arith.constant dense<0.000000e+00> : vector<1x8x1xf32>
    %33 = vector.multi_reduction <add>, %32, %cst_21 [1] : vector<1x4x8x1xf32> to vector<1x8x1xf32>
    %34 = vector.shape_cast %33 : vector<1x8x1xf32> to vector<1x1x8x1xf32>
    %35 = tpu.reciprocal %34 {approx = true} : vector<1x1x8x1xf32> -> vector<1x1x8x1xf32>
    %36 = vector.broadcast %35 : vector<1x1x8x1xf32> to vector<1x4x8x1xf32>
    %37 = arith.mulf %32, %36 : vector<1x4x8x1xf32>
    %38 = vector.broadcast %37 : vector<1x4x8x1xf32> to vector<1x4x8x16xf32>
    %39 = arith.mulf %38, %25 : vector<1x4x8x16xf32>
    %cst_22 = arith.constant dense<0.000000e+00> : vector<1x8x16xf32>
    %40 = vector.multi_reduction <add>, %39, %cst_22 [1] : vector<1x4x8x16xf32> to vector<1x8x16xf32>
    %c0_23 = arith.constant 0 : index
    %c0_24 = arith.constant 0 : index
    %c0_25 = arith.constant 0 : index
    %41 = vector.load %arg8[%c0_23, %c0_24, %c0_25] : memref<1x8x16xf32, #tpu.memory_space<vmem>>, vector<1x8x16xf32>
    tpu.vector_store %arg8[%c0_23, %c0_24, %c0_25], %40 {strides = array<i32>} : memref<1x8x16xf32, #tpu.memory_space<vmem>>, vector<1x8x16xf32>,
    return
  }
  func.func @transform_0(%arg0: i32) -> (i32, i32, i32) {
    %c0_i32 = arith.constant 0 : i32
    %c0_i32_0 = arith.constant 0 : i32
    %c0_i32_1 = arith.constant 0 : i32
    return %arg0, %c0_i32, %c0_i32_0 : i32, i32, i32
  }
  func.func @transform_1(%arg0: i32) -> (i32, i32, i32, i32) {
    %c0_i32 = arith.constant 0 : i32
    %c0_i32_0 = arith.constant 0 : i32
    %c0_i32_1 = arith.constant 0 : i32
    %c0_i32_2 = arith.constant 0 : i32
    return %arg0, %c0_i32, %c0_i32_0, %c0_i32_1 : i32, i32, i32, i32
  }
  func.func @transform_2(%arg0: i32) -> (i32, i32) {
    %c0_i32 = arith.constant 0 : i32
    %c0_i32_0 = arith.constant 0 : i32
    %c0_i32_1 = arith.constant 0 : i32
    return %c0_i32, %c0_i32_0 : i32, i32
  }
  func.func @transform_3(%arg0: i32) -> (i32, i32) {
    %c0_i32 = arith.constant 0 : i32
    %c0_i32_0 = arith.constant 0 : i32
    %c0_i32_1 = arith.constant 0 : i32
    return %c0_i32, %c0_i32_0 : i32, i32
  }
  func.func @transform_4(%arg0: i32) -> (i32, i32) {
    %c0_i32 = arith.constant 0 : i32
    %c0_i32_0 = arith.constant 0 : i32
    %c0_i32_1 = arith.constant 0 : i32
    return %c0_i32, %c0_i32_0 : i32, i32
  }
  func.func @transform_5(%arg0: i32) -> (i32, i32) {
    %c0_i32 = arith.constant 0 : i32
    %c0_i32_0 = arith.constant 0 : i32
    %c0_i32_1 = arith.constant 0 : i32
    return %c0_i32, %c0_i32_0 : i32, i32
  }
  func.func @transform_6(%arg0: i32) -> (i32, i32) {
    %c0_i32 = arith.constant 0 : i32
    %c0_i32_0 = arith.constant 0 : i32
    %c0_i32_1 = arith.constant 0 : i32
    return %c0_i32, %c0_i32_0 : i32, i32
  }
  func.func @transform_7(%arg0: i32) -> (i32, i32, i32) {
    %c0_i32 = arith.constant 0 : i32
    %c0_i32_0 = arith.constant 0 : i32
    %c0_i32_1 = arith.constant 0 : i32
    return %arg0, %c0_i32, %c0_i32_0 : i32, i32, i32
  }
}

</mosaic_0001>

<llo_original>
// kernel: tpu_custom_call.1
$region0: #{tpu_custom_call.1}
  #allocation0 [shape = 'u32[]', space=smem, size = 0x4, offset = 0x4, fixed_abs, tag = 'smem constant byte address 0x4 - core index']
  #allocation1 [shape = 'u32[144,128]{1,0:T(1,128)}', space=vmem, size = 0x12000, scoped, tag = 'internal scratch']
  %s0 = inlined_call_operand.hbm [shape: f32[2,8,16], index: 0, kind: input, shape index: {}]
  %s1 = inlined_call_operand.hbm [shape: f32[2,4,1,24], index: 1, kind: input, shape index: {}]
  %s2 = inlined_call_operand.hbm [shape: f32[16,24], index: 2, kind: input, shape index: {}]
  %s3 = inlined_call_operand.hbm [shape: f32[24,24], index: 3, kind: input, shape index: {}]
  %s4 = inlined_call_operand.vmem [shape: f32[1,24], index: 4, kind: input, shape index: {}]
  %s5 = inlined_call_operand.hbm [shape: f32[24,17], index: 5, kind: input, shape index: {}]
  %s6 = inlined_call_operand.vmem [shape: f32[1,17], index: 6, kind: input, shape index: {}]
  %s7 = inlined_call_operand.hbm [shape: f32[2,8,16], index: 7, kind: output, shape index: {}]
  %s8 = sld [smem:[#allocation0]]
  $region81: #{tpu_custom_call.1} parent=0
    _
  %s10 = ssub.s32 1, %s8
  %s11 = scalar_select 0, %s10, %s8
  $region1: #{tpu_custom_call.1} parent=0
    #allocation2 [shape = 'u8[8192]{0}', space=vmem, size = 0x2000, scoped, tag = 'input window, operand 0']
    #allocation3 [shape = 's32[2]{0}', space=sflag, size = 0x8, scoped, tag = 'scoped memory for tpu_custom_call.1']
    #allocation4 [shape = 's32[2]{0}', space=sflag, size = 0x8, scoped, tag = 'scoped memory for tpu_custom_call.1']
    #allocation5 [shape = 'u8[4096]{0}', space=vmem, size = 0x1000, scoped, tag = 'input window, operand 1']
    #allocation6 [shape = 's32[2]{0}', space=sflag, size = 0x8, scoped, tag = 'scoped memory for tpu_custom_call.1']
    #allocation7 [shape = 'u8[8192]{0}', space=vmem, size = 0x2000, scoped, tag = 'input window, operand 2, single buffered']
    #allocation8 [shape = 'u8[12288]{0}', space=vmem, size = 0x3000, scoped, tag = 'input window, operand 3, single buffered']
    #allocation9 [shape = 's32[1]{0}', space=sflag, size = 0x4, scoped, tag = 'scoped memory for tpu_custom_call.1']
    #allocation10 [shape = 'u8[12288]{0}', space=vmem, size = 0x3000, scoped, tag = 'input window, operand 5, single buffered']
    #allocation11 [shape = 'u8[8192]{0}', space=vmem, size = 0x2000, scoped, tag = 'output window, operand 0']
    %12 = vsyncpa [#allocation3], 0
    %s13 = scalar_lea.sflag [#allocation3], 1
    %14 = vsyncpa %s13, 0
    %15 = vsyncpa [#allocation6], 0
    %s16 = scalar_lea.sflag [#allocation6], 1
    %17 = vsyncpa %s16, 0
    %18 = vsyncpa [#allocation9], 0
    %19 = vsyncpa [#allocation4], 0
    %s20 = scalar_lea.sflag [#allocation4], 1
    %21 = vsyncpa %s20, 0
    loop: start=0, step=1, limit=4
    $region2: #{tpu_custom_call.1} parent=1 // loop_pre_header
      _
    $region3: #{tpu_custom_call.1} parent=1 // loop_header
      %s23 = sphi 0, %s27
      %p24 = scmp.ge.s32.totalorder %s23, 4
      %s33 = sphi 0, %s35
      %s36 = sphi 0, %s33
      %s37 = sphi 0, %s36
      %s53 = sphi 0, %s37
      %s59 = sphi 0, %s61
      %s62 = sphi 0, %s59
      %s63 = sphi 0, %s62
      %s79 = sphi 0, %s63
      %s83 = sphi 0, %s83
      %s85 = sphi 0, %s83
      %s86 = sphi 0, %s85
      %s100 = sphi 0, %s86
      %s104 = sphi 0, %s104
      %s106 = sphi 0, %s104
      %s107 = sphi 0, %s106
      %s121 = sphi 0, %s107
      %s125 = sphi 0, %s125
      %s127 = sphi 0, %s125
      %s128 = sphi 0, %s127
      %s142 = sphi 0, %s128
      %s146 = sphi 0, %s146
      %s148 = sphi 0, %s146
      %s149 = sphi 0, %s148
      %s163 = sphi 0, %s149
      %s167 = sphi 0, %s167
      %s169 = sphi 0, %s167
      %s170 = sphi 0, %s169
      %s184 = sphi 0, %s170
      %s190 = sphi 0, %s192
      %s193 = sphi 0, %s190
      %s194 = sphi 0, %s193
      %s210 = sphi 0, %s194
    $region4: #{tpu_custom_call.1} parent=1 // loop_header_branch
      %26 = sbr.rel (%p24) target = $region8
    $region5: #{tpu_custom_call.1} parent=1 // loop_body
      %s28 = ssub.s32 %s23, 1
      %s29 = ssub.s32 %s23, 2
      %s30 = sadd.s32 %s23, 1
      %s31 = ssub.s32 %s23, %s30
      %p32 = scmp.eq.s32.totalorder %s31, 0
      %s34 = sadd.s32 %s33, 1
      %s35 = scalar_select %p32, %s33, %s34
      %p38 = pneg %p32
      %p39 = scmp.eq.s32.totalorder %s23, 1
      %p40 = por %p38, %p39
      %p41 = scmp.ne.s32.totalorder %s33, %s36
      %p42 = scmp.eq.s32.totalorder %s23, 0
      %p43 = por %p41, %p42
      %p44 = scmp.ne.s32.totalorder %s33, %s36
      %p45 = scmp.eq.s32.totalorder %s28, 1
      %p46 = por %p44, %p45
      %p47 = scmp.ne.s32.totalorder %s36, %s37
      %p48 = scmp.eq.s32.totalorder %s28, 0
      %p49 = por %p47, %p48
      %p50 = scmp.ne.s32.totalorder %s36, %s37
      %p51 = scmp.eq.s32.totalorder %s29, 1
      %p52 = por %p50, %p51
      %p54 = scmp.ne.s32.totalorder %s37, %s53
      %p55 = scmp.eq.s32.totalorder %s29, 0
      %p56 = por %p54, %p55
      %s57 = ssub.s32 %s23, %s30
      %p58 = scmp.eq.s32.totalorder %s57, 0
      %s60 = sadd.s32 %s59, 1
      %s61 = scalar_select %p58, %s59, %s60
      %p64 = pneg %p58
      %p65 = scmp.eq.s32.totalorder %s23, 1
      %p66 = por %p64, %p65
      %p67 = scmp.ne.s32.totalorder %s59, %s62
      %p68 = scmp.eq.s32.totalorder %s23, 0
      %p69 = por %p67, %p68
      %p70 = scmp.ne.s32.totalorder %s59, %s62
      %p71 = scmp.eq.s32.totalorder %s28, 1
      %p72 = por %p70, %p71
      %p73 = scmp.ne.s32.totalorder %s62, %s63
      %p74 = scmp.eq.s32.totalorder %s28, 0
      %p75 = por %p73, %p74
      %p76 = scmp.ne.s32.totalorder %s62, %s63
      %p77 = scmp.eq.s32.totalorder %s29, 1
      %p78 = por %p76, %p77
      %p80 = scmp.ne.s32.totalorder %s63, %s79
      %p81 = scmp.eq.s32.totalorder %s29, 0
      %p82 = por %p80, %p81
      %s84 = sadd.s32 %s83, 1
      %p87 = scmp.eq.s32.totalorder %s23, 1
      %p88 = scmp.ne.s32.totalorder %s83, %s85
      %p89 = scmp.eq.s32.totalorder %s23, 0
      %p90 = por %p88, %p89
      %p91 = scmp.ne.s32.totalorder %s83, %s85
      %p92 = scmp.eq.s32.totalorder %s28, 1
      %p93 = por %p91, %p92
      %p94 = scmp.ne.s32.totalorder %s85, %s86
      %p95 = scmp.eq.s32.totalorder %s28, 0
      %p96 = por %p94, %p95
      %p97 = scmp.ne.s32.totalorder %s85, %s86
      %p98 = scmp.eq.s32.totalorder %s29, 1
      %p99 = por %p97, %p98
      %p101 = scmp.ne.s32.totalorder %s86, %s100
      %p102 = scmp.eq.s32.totalorder %s29, 0
      %p103 = por %p101, %p102
      %s105 = sadd.s32 %s104, 1
      %p108 = scmp.eq.s32.totalorder %s23, 1
      %p109 = scmp.ne.s32.totalorder %s104, %s106
      %p110 = scmp.eq.s32.totalorder %s23, 0
      %p111 = por %p109, %p110
      %p112 = scmp.ne.s32.totalorder %s104, %s106
      %p113 = scmp.eq.s32.totalorder %s28, 1
      %p114 = por %p112, %p113
      %p115 = scmp.ne.s32.totalorder %s106, %s107
      %p116 = scmp.eq.s32.totalorder %s28, 0
      %p117 = por %p115, %p116
      %p118 = scmp.ne.s32.totalorder %s106, %s107
      %p119 = scmp.eq.s32.totalorder %s29, 1
      %p120 = por %p118, %p119
      %p122 = scmp.ne.s32.totalorder %s107, %s121
      %p123 = scmp.eq.s32.totalorder %s29, 0
      %p124 = por %p122, %p123
      %s126 = sadd.s32 %s125, 1
      %p129 = scmp.eq.s32.totalorder %s23, 1
      %p130 = scmp.ne.s32.totalorder %s125, %s127
      %p131 = scmp.eq.s32.totalorder %s23, 0
      %p132 = por %p130, %p131
      %p133 = scmp.ne.s32.totalorder %s125, %s127
      %p134 = scmp.eq.s32.totalorder %s28, 1
      %p135 = por %p133, %p134
      %p136 = scmp.ne.s32.totalorder %s127, %s128
      %p137 = scmp.eq.s32.totalorder %s28, 0
      %p138 = por %p136, %p137
      %p139 = scmp.ne.s32.totalorder %s127, %s128
      %p140 = scmp.eq.s32.totalorder %s29, 1
      %p141 = por %p139, %p140
      %p143 = scmp.ne.s32.totalorder %s128, %s142
      %p144 = scmp.eq.s32.totalorder %s29, 0
      %p145 = por %p143, %p144
      %s147 = sadd.s32 %s146, 1
      %p150 = scmp.eq.s32.totalorder %s23, 1
      %p151 = scmp.ne.s32.totalorder %s146, %s148
      %p152 = scmp.eq.s32.totalorder %s23, 0
      %p153 = por %p151, %p152
      %p154 = scmp.ne.s32.totalorder %s146, %s148
      %p155 = scmp.eq.s32.totalorder %s28, 1
      %p156 = por %p154, %p155
      %p157 = scmp.ne.s32.totalorder %s148, %s149
      %p158 = scmp.eq.s32.totalorder %s28, 0
      %p159 = por %p157, %p158
      %p160 = scmp.ne.s32.totalorder %s148, %s149
      %p161 = scmp.eq.s32.totalorder %s29, 1
      %p162 = por %p160, %p161
      %p164 = scmp.ne.s32.totalorder %s149, %s163
      %p165 = scmp.eq.s32.totalorder %s29, 0
      %p166 = por %p164, %p165
      %s168 = sadd.s32 %s167, 1
      %p171 = scmp.eq.s32.totalorder %s23, 1
      %p172 = scmp.ne.s32.totalorder %s167, %s169
      %p173 = scmp.eq.s32.totalorder %s23, 0
      %p174 = por %p172, %p173
      %p175 = scmp.ne.s32.totalorder %s167, %s169
      %p176 = scmp.eq.s32.totalorder %s28, 1
      %p177 = por %p175, %p176
      %p178 = scmp.ne.s32.totalorder %s169, %s170
      %p179 = scmp.eq.s32.totalorder %s28, 0
      %p180 = por %p178, %p179
      %p181 = scmp.ne.s32.totalorder %s169, %s170
      %p182 = scmp.eq.s32.totalorder %s29, 1
      %p183 = por %p181, %p182
      %p185 = scmp.ne.s32.totalorder %s170, %s184
      %p186 = scmp.eq.s32.totalorder %s29, 0
      %p187 = por %p185, %p186
      %s188 = ssub.s32 %s23, %s30
      %p189 = scmp.eq.s32.totalorder %s188, 0
      %s191 = sadd.s32 %s190, 1
      %s192 = scalar_select %p189, %s190, %s191
      %p195 = pneg %p189
      %p196 = scmp.eq.s32.totalorder %s23, 1
      %p197 = por %p195, %p196
      %p198 = scmp.ne.s32.totalorder %s190, %s193
      %p199 = scmp.eq.s32.totalorder %s23, 0
      %p200 = por %p198, %p199
      %p201 = scmp.ne.s32.totalorder %s190, %s193
      %p202 = scmp.eq.s32.totalorder %s28, 1
      %p203 = por %p201, %p202
      %p204 = scmp.ne.s32.totalorder %s193, %s194
      %p205 = scmp.eq.s32.totalorder %s28, 0
      %p206 = por %p204, %p205
      %p207 = scmp.ne.s32.totalorder %s193, %s194
      %p208 = scmp.eq.s32.totalorder %s29, 1
      %p209 = por %p207, %p208
      %p211 = scmp.ne.s32.totalorder %s194, %s210
      %p212 = scmp.eq.s32.totalorder %s29, 0
      %p213 = por %p211, %p212
      %p214 = scmp.le.s32.totalorder 1, %s23
      %p215 = scmp.lt.s32.totalorder %s23, 3
      %p216 = pnand %p214, %p215
      %p217 = pneg %p216
      // Predicated region
      $region9: #{tpu_custom_call.1} parent=5 // pred_check
        _
      $region10: #{tpu_custom_call.1} parent=5 // pred_check_branch
        %219 = sbr.rel (%p216) target = $region12
      $region11: #{tpu_custom_call.1} parent=5 // pred_region
        %s220 = ssub.s32 %s23, 1
        // Predicated region
        $region13: #{tpu_custom_call.1} parent=11 // pred_check
          %p221 = pneg %p96
        $region14: #{tpu_custom_call.1} parent=11 // pred_check_branch
          %223 = sbr.rel (%p221) target = $region16
        $region15: #{tpu_custom_call.1} parent=11 // pred_region
          %s225 = ssub.s32 256, 256
          %226 = vsyncadd [#allocation6], %s225
          %s227 = sshll.u32 [#allocation7], 4
          %s228 = int_to_ptr.vmem [resolvable:$true] %s227
          %233 = dma.hbm_to_vmem [thread:$0]  %s2, 256, %s228, [#allocation6], 128, 128, 8
        $region16: #{tpu_custom_call.1} parent=11 // pred_fallthru
          _
        // Predicated region
        $region17: #{tpu_custom_call.1} parent=11 // pred_check
          %p234 = pneg %p117
        $region18: #{tpu_custom_call.1} parent=11 // pred_check_branch
          %236 = sbr.rel (%p234) target = $region20
        $region19: #{tpu_custom_call.1} parent=11 // pred_region
          %s238 = ssub.s32 384, 384
          %239 = vsyncadd [#allocation9], %s238
          %s240 = sshll.u32 [#allocation8], 4
          %s241 = int_to_ptr.vmem [resolvable:$true] %s240
          %246 = dma.hbm_to_vmem [thread:$0]  %s3, 384, %s241, [#allocation9], 128, 128, 8
        $region20: #{tpu_custom_call.1} parent=11 // pred_fallthru
          _
        // Predicated region
        $region21: #{tpu_custom_call.1} parent=11 // pred_check
          %p247 = pneg %p138
        $region22: #{tpu_custom_call.1} parent=11 // pred_check_branch
          %249 = sbr.rel (%p247) target = $region24
        $region23: #{tpu_custom_call.1} parent=11 // pred_region
          _
        $region24: #{tpu_custom_call.1} parent=11 // pred_fallthru
          _
        // Predicated region
        $region25: #{tpu_custom_call.1} parent=11 // pred_check
          %p250 = pneg %p159
        $region26: #{tpu_custom_call.1} parent=11 // pred_check_branch
          %252 = sbr.rel (%p250) target = $region28
        $region27: #{tpu_custom_call.1} parent=11 // pred_region
          %s254 = ssub.s32 384, 384
          %255 = vsyncadd [#allocation9], %s254
          %s256 = sshll.u32 [#allocation10], 4
          %s257 = int_to_ptr.vmem [resolvable:$true] %s256
          %262 = dma.hbm_to_vmem [thread:$0]  %s5, 384, %s257, [#allocation9], 128, 128, 8
        $region28: #{tpu_custom_call.1} parent=11 // pred_fallthru
          _
        // Predicated region
        $region29: #{tpu_custom_call.1} parent=11 // pred_check
          %p263 = pneg %p180
        $region30: #{tpu_custom_call.1} parent=11 // pred_check_branch
          %265 = sbr.rel (%p263) target = $region32
        $region31: #{tpu_custom_call.1} parent=11 // pred_region
          _
        $region32: #{tpu_custom_call.1} parent=11 // pred_fallthru
          _
      $region12: #{tpu_custom_call.1} parent=5 // pred_fallthru
        _
      %p266 = scmp.lt.s32.totalorder %s23, 2
      // Predicated region
      $region33: #{tpu_custom_call.1} parent=5 // pred_check
        %p267 = pneg %p266
      $region34: #{tpu_custom_call.1} parent=5 // pred_check_branch
        %269 = sbr.rel (%p267) target = $region36
      $region35: #{tpu_custom_call.1} parent=5 // pred_region
        // Predicated region
        $region37: #{tpu_custom_call.1} parent=35 // pred_check
          %p270 = pneg %p43
        $region38: #{tpu_custom_call.1} parent=35 // pred_check_branch
          %272 = sbr.rel (%p270) target = $region40
        $region39: #{tpu_custom_call.1} parent=35 // pred_region
          %s273 = sand.u32 %s33, 1
          %s274 = scalar_lea.sflag [#allocation3], %s273
          %s275 = sand.u32 %s33, 1
          %s276 = smul.addr %s275, 8
          %s277 = scalar_lea.vmem [#allocation2], %s276
          %s279 = ssub.s32 128, 128
          %280 = vsyncadd %s274, %s279
          %s281 = smul.addr %s23, 128
          %s282 = scalar_lea.hbm %s0, %s281
          %s284 = sshll.u32 %s277, 4
          %s285 = int_to_ptr.vmem [resolvable:$true] %s284
          %287 = dma.hbm_to_vmem [thread:$0]  %s282, 128, %s285, %s274
        $region40: #{tpu_custom_call.1} parent=35 // pred_fallthru
          _
        // Predicated region
        $region41: #{tpu_custom_call.1} parent=35 // pred_check
          %p288 = pneg %p69
        $region42: #{tpu_custom_call.1} parent=35 // pred_check_branch
          %290 = sbr.rel (%p288) target = $region44
        $region43: #{tpu_custom_call.1} parent=35 // pred_region
          %s291 = sand.u32 %s23, 1
          %s292 = scalar_lea.sflag [#allocation6], %s291
          %s293 = sand.u32 %s59, 1
          %s294 = smul.addr %s293, 4
          %s295 = scalar_lea.vmem [#allocation5], %s294
          %s297 = ssub.s32 64, 64
          %298 = vsyncadd %s292, %s297
          %s299 = smul.addr %s23, 4
          %s300 = smul.addr %s299, 16
          %s301 = scalar_lea.hbm %s1, %s300
          %s302 = sshll.u32 %s295, 4
          %s303 = int_to_ptr.vmem [resolvable:$true] %s302
          %308 = dma.hbm_to_vmem [thread:$0]  %s301, 64, %s303, %s292, 16, 16, 1
        $region44: #{tpu_custom_call.1} parent=35 // pred_fallthru
          _
      $region36: #{tpu_custom_call.1} parent=5 // pred_fallthru
        _
      %p309 = scmp.le.s32.totalorder 1, %s23
      %p310 = scmp.lt.s32.totalorder %s23, 3
      %p311 = pnand %p309, %p310
      %p312 = pneg %p311
      // Predicated region
      $region45: #{tpu_custom_call.1} parent=5 // pred_check
        _
      $region46: #{tpu_custom_call.1} parent=5 // pred_check_branch
        %314 = sbr.rel (%p311) target = $region48
      $region47: #{tpu_custom_call.1} parent=5 // pred_region
        %s315 = ssub.s32 %s23, 1
        %s316 = sand.u32 %s36, 1
        %s317 = scalar_lea.sflag [#allocation3], %s316
        %s318 = sand.u32 %s36, 1
        %s319 = smul.addr %s318, 8
        %s320 = scalar_lea.vmem [#allocation2], %s319
        // Predicated region
        $region49: #{tpu_custom_call.1} parent=47 // pred_check
          %p321 = pneg %p49
        $region50: #{tpu_custom_call.1} parent=47 // pred_check_branch
          %323 = sbr.rel (%p321) target = $region52
        $region51: #{tpu_custom_call.1} parent=47 // pred_region
          %324 = dma.done %s317, 128
        $region52: #{tpu_custom_call.1} parent=47 // pred_fallthru
          _
        %s325 = sand.u32 %s28, 1
        %s326 = scalar_lea.sflag [#allocation6], %s325
        %s327 = sand.u32 %s62, 1
        %s328 = smul.addr %s327, 4
        %s329 = scalar_lea.vmem [#allocation5], %s328
        // Predicated region
        $region53: #{tpu_custom_call.1} parent=47 // pred_check
          %p330 = pneg %p75
        $region54: #{tpu_custom_call.1} parent=47 // pred_check_branch
          %332 = sbr.rel (%p330) target = $region56
        $region55: #{tpu_custom_call.1} parent=47 // pred_region
          %333 = dma.done %s326, 64
        $region56: #{tpu_custom_call.1} parent=47 // pred_fallthru
          _
        // Predicated region
        $region57: #{tpu_custom_call.1} parent=47 // pred_check
          %p334 = pneg %p96
        $region58: #{tpu_custom_call.1} parent=47 // pred_check_branch
          %336 = sbr.rel (%p334) target = $region60
        $region59: #{tpu_custom_call.1} parent=47 // pred_region
          %337 = dma.done [#allocation6], 256
        $region60: #{tpu_custom_call.1} parent=47 // pred_fallthru
          _
        // Predicated region
        $region61: #{tpu_custom_call.1} parent=47 // pred_check
          %p338 = pneg %p117
        $region62: #{tpu_custom_call.1} parent=47 // pred_check_branch
          %340 = sbr.rel (%p338) target = $region64
        $region63: #{tpu_custom_call.1} parent=47 // pred_region
          %341 = dma.done [#allocation9], 384
        $region64: #{tpu_custom_call.1} parent=47 // pred_fallthru
          _
        // Predicated region
        $region65: #{tpu_custom_call.1} parent=47 // pred_check
          %p342 = pneg %p159
        $region66: #{tpu_custom_call.1} parent=47 // pred_check_branch
          %344 = sbr.rel (%p342) target = $region68
        $region67: #{tpu_custom_call.1} parent=47 // pred_region
          %345 = dma.done [#allocation9], 384
        $region68: #{tpu_custom_call.1} parent=47 // pred_fallthru
          _
        %s346 = sand.u32 %s36, 1
        %s347 = scalar_lea.sflag [#allocation3], %s346
        %s348 = sand.u32 %s36, 1
        %s349 = smul.addr %s348, 8
        %s350 = scalar_lea.vmem [#allocation2], %s349
        %p351 = pneg %p49
        %p352 = pneg %p46
        %s353 = sand.u32 %s28, 1
        %s354 = scalar_lea.sflag [#allocation6], %s353
        %s355 = sand.u32 %s62, 1
        %s356 = smul.addr %s355, 4
        %s357 = scalar_lea.vmem [#allocation5], %s356
        %p358 = pneg %p75
        %p359 = pneg %p72
        %p360 = pneg %p96
        %p361 = pneg %p93
        %p362 = pneg %p117
        %p363 = pneg %p114
        %p364 = pneg %p138
        %p365 = pneg %p135
        %p366 = pneg %p159
        %p367 = pneg %p156
        %p368 = pneg %p180
        %p369 = pneg %p177
        %p370 = pneg %p206
        %p371 = pneg %p203
        %s372 = sand.u32 %s193, 1
        %s373 = scalar_lea.sflag [#allocation4], %s372
        %s374 = sand.u32 %s193, 1
        %s375 = smul.addr %s374, 8
        %s376 = scalar_lea.vmem [#allocation11], %s375
        %v377 = vld [vmem:[%s320] sm:$0xff]
        %v378 = vld [vmem:[#allocation7] sm:$0xff]
        %v379 = vld [vmem:[#allocation7 + $0x8] sm:$0xff]
        %vm380 = vcmask 130048
        %v382 = vsel %vm380, %v377, 0
        %384 = vmatprep.subr.mxu0 0.0
        %385 = vmatpush1.msra.mxu0 %v378
        %386 = vmatprep.subr.mxu0 0.0
        %387 = vmatpush1.msra.mxu0 %v379
        %388 = vmatprep.subr.mxu0 0.0
        %389 = vmatpush1.msra.mxu0 0.0
        %390 = vmatprep.subr.mxu0 0.0
        %391 = vmatpush1.msra.mxu0 0.0
        %392 = vmatprep.subr.mxu0 0.0
        %393 = vmatpush1.msra.mxu0 0.0
        %394 = vmatprep.subr.mxu0 0.0
        %395 = vmatpush1.msra.mxu0 0.0
        %396 = vmatprep.subr.mxu0 0.0
        %397 = vmatpush1.msra.mxu0 0.0
        %398 = vmatprep.subr.mxu0 0.0
        %399 = vmatpush1.msra.mxu0 0.0
        %400 = vmatprep.subr.mxu0 0.0
        %401 = vmatpush1.msra.mxu0 0.0
        %402 = vmatprep.subr.mxu0 0.0
        %403 = vmatpush1.msra.mxu0 0.0
        %404 = vmatprep.subr.mxu0 0.0
        %405 = vmatpush1.msra.mxu0 0.0
        %406 = vmatprep.subr.mxu0 0.0
        %407 = vmatpush1.msra.mxu0 0.0
        %408 = vmatprep.subr.mxu0 0.0
        %409 = vmatpush1.msra.mxu0 0.0
        %410 = vmatprep.subr.mxu0 0.0
        %411 = vmatpush1.msra.mxu0 0.0
        %412 = vmatprep.subr.mxu0 0.0
        %413 = vmatpush1.msra.mxu0 0.0
        %414 = vmatprep.subr.mxu0 0.0
        %415 = vmatpush1.msra.mxu0 0.0
        %416 = vmatprep.subr.mxu0 0.0
        %417 = vmatpush1.msra.mxu0 0.0
        %418 = vmatprep.subr.mxu0 0.0
        %419 = vmatpush1.msra.mxu0 0.0
        %420 = vmatprep.subr.mxu0 0.0
        %421 = vmatpush1.msra.mxu0 0.0
        %422 = vmatprep.subr.mxu0 0.0
        %423 = vmatpush1.msra.mxu0 0.0
        %424 = vmatprep.subr.mxu0 0.0
        %425 = vmatpush1.msra.mxu0 0.0
        %426 = vmatprep.subr.mxu0 0.0
        %427 = vmatpush1.msra.mxu0 0.0
        %428 = vmatprep.subr.mxu0 0.0
        %429 = vmatpush1.msra.mxu0 0.0
        %430 = vmatprep.subr.mxu0 0.0
        %431 = vmatpush1.msra.mxu0 0.0
        %432 = vmatprep.subr.mxu0 0.0
        %433 = vmatpush1.msra.mxu0 0.0
        %434 = vmatprep.subr.mxu0 0.0
        %435 = vmatpush1.msra.mxu0 0.0
        %436 = vmatprep.subr.mxu0 0.0
        %437 = vmatpush1.msra.mxu0 0.0
        %438 = vmatprep.subr.mxu0 0.0
        %439 = vmatpush1.msra.mxu0 0.0
        %440 = vmatprep.subr.mxu0 0.0
        %441 = vmatpush1.msra.mxu0 0.0
        %442 = vmatprep.subr.mxu0 0.0
        %443 = vmatpush1.msra.mxu0 0.0
        %444 = vmatprep.subr.mxu0 0.0
        %445 = vmatpush1.msra.mxu0 0.0
        %446 = vmatprep.subr.mxu0 0.0
        %447 = vmatpush1.msra.mxu0 0.0
        %448 = vmatprep.mubr.f32.mxu0 0.0
        %449 = vmatmul.mubr.f32.gmra.mrb[0].mxu0 %v382
        %v450 = vpop.f32.mrb[0].mxu0
        %v451 = vadd.f32 0.0, %v450
        %v452 = vpop.f32.mrb[0].mxu0
        %453 = vdwg.mxu0
        %v454 = vld [vmem:[%s329] sm:$0x1]
        %v455 = vld [vmem:[%s329 + $0x1] sm:$0x1]
        %v456 = vld [vmem:[%s329 + $0x2] sm:$0x1]
        %v457 = vld [vmem:[%s329 + $0x3] sm:$0x1]
        %v462 = vlaneseq
        %v463 = vshrl.u32 %v462, 7
        %v464 = vsub.s32 0, %v463
        %v465 = vrot.slane %v454, %v464
        %v466 = vlaneseq
        %v467 = vshrl.u32 %v466, 7
        %v468 = vsub.s32 0, %v467
        %v469 = vrot.slane %v455, %v468
        %v470 = vlaneseq
        %v471 = vshrl.u32 %v470, 7
        %v472 = vsub.s32 0, %v471
        %v473 = vrot.slane %v456, %v472
        %v474 = vlaneseq
        %v475 = vshrl.u32 %v474, 7
        %v476 = vsub.s32 0, %v475
        %v477 = vrot.slane %v457, %v476
        %v482 = vadd.f32 %v451, %v465
        %v483 = vadd.f32 %v451, %v469
        %v484 = vadd.f32 %v451, %v473
        %v485 = vadd.f32 %v451, %v477
        %v486 = vmax.f32 %v482, 0.0
        %v487 = vmax.f32 %v483, 0.0
        %v488 = vmax.f32 %v484, 0.0
        %v489 = vmax.f32 %v485, 0.0
        %v490 = vld [vmem:[#allocation8] sm:$0xff]
        %v491 = vld [vmem:[#allocation8 + $0x8] sm:$0xff]
        %v492 = vld [vmem:[#allocation8 + $0x10] sm:$0xff]
        %v493 = vld [vmem:[%s4] sm:$0x1]
        %v495 = vlaneseq
        %v496 = vshrl.u32 %v495, 7
        %v497 = vsub.s32 0, %v496
        %v498 = vrot.slane %v493, %v497
        %vm500 = vcmask 195584
        %v502 = vsel %vm500, %v486, 0
        %v505 = vsel %vm500, %v487, 0
        %v508 = vsel %vm500, %v488, 0
        %v511 = vsel %vm500, %v489, 0
        %513 = vmatprep.subr.mxu0 0.0
        %514 = vmatpush1.msra.mxu0 %v490
        %515 = vmatprep.subr.mxu0 0.0
        %516 = vmatpush1.msra.mxu0 %v491
        %517 = vmatprep.subr.mxu0 0.0
        %518 = vmatpush1.msra.mxu0 %v492
        %519 = vmatprep.subr.mxu0 0.0
        %520 = vmatpush1.msra.mxu0 0.0
        %521 = vmatprep.subr.mxu0 0.0
        %522 = vmatpush1.msra.mxu0 0.0
        %523 = vmatprep.subr.mxu0 0.0
        %524 = vmatpush1.msra.mxu0 0.0
        %525 = vmatprep.subr.mxu0 0.0
        %526 = vmatpush1.msra.mxu0 0.0
        %527 = vmatprep.subr.mxu0 0.0
        %528 = vmatpush1.msra.mxu0 0.0
        %529 = vmatprep.subr.mxu0 0.0
        %530 = vmatpush1.msra.mxu0 0.0
        %531 = vmatprep.subr.mxu0 0.0
        %532 = vmatpush1.msra.mxu0 0.0
        %533 = vmatprep.subr.mxu0 0.0
        %534 = vmatpush1.msra.mxu0 0.0
        %535 = vmatprep.subr.mxu0 0.0
        %536 = vmatpush1.msra.mxu0 0.0
        %537 = vmatprep.subr.mxu0 0.0
        %538 = vmatpush1.msra.mxu0 0.0
        %539 = vmatprep.subr.mxu0 0.0
        %540 = vmatpush1.msra.mxu0 0.0
        %541 = vmatprep.subr.mxu0 0.0
        %542 = vmatpush1.msra.mxu0 0.0
        %543 = vmatprep.subr.mxu0 0.0
        %544 = vmatpush1.msra.mxu0 0.0
        %545 = vmatprep.subr.mxu0 0.0
        %546 = vmatpush1.msra.mxu0 0.0
        %547 = vmatprep.subr.mxu0 0.0
        %548 = vmatpush1.msra.mxu0 0.0
        %549 = vmatprep.subr.mxu0 0.0
        %550 = vmatpush1.msra.mxu0 0.0
        %551 = vmatprep.subr.mxu0 0.0
        %552 = vmatpush1.msra.mxu0 0.0
        %553 = vmatprep.subr.mxu0 0.0
        %554 = vmatpush1.msra.mxu0 0.0
        %555 = vmatprep.subr.mxu0 0.0
        %556 = vmatpush1.msra.mxu0 0.0
        %557 = vmatprep.subr.mxu0 0.0
        %558 = vmatpush1.msra.mxu0 0.0
        %559 = vmatprep.subr.mxu0 0.0
        %560 = vmatpush1.msra.mxu0 0.0
        %561 = vmatprep.subr.mxu0 0.0
        %562 = vmatpush1.msra.mxu0 0.0
        %563 = vmatprep.subr.mxu0 0.0
        %564 = vmatpush1.msra.mxu0 0.0
        %565 = vmatprep.subr.mxu0 0.0
        %566 = vmatpush1.msra.mxu0 0.0
        %567 = vmatprep.subr.mxu0 0.0
        %568 = vmatpush1.msra.mxu0 0.0
        %569 = vmatprep.subr.mxu0 0.0
        %570 = vmatpush1.msra.mxu0 0.0
        %571 = vmatprep.subr.mxu0 0.0
        %572 = vmatpush1.msra.mxu0 0.0
        %573 = vmatprep.subr.mxu0 0.0
        %574 = vmatpush1.msra.mxu0 0.0
        %575 = vmatprep.subr.mxu0 0.0
        %576 = vmatpush1.msra.mxu0 0.0
        %577 = vmatprep.mubr.f32.mxu0 0.0
        %578 = vmatmul.mubr.f32.gmra.mrb[0].mxu0 %v502
        %v579 = vpop.f32.mrb[0].mxu0
        %v580 = vadd.f32 %v498, %v579
        %v581 = vpop.f32.mrb[0].mxu0
        %582 = vmatprep.mubr.f32.mxu0 0.0
        %583 = vmatmul.mubr.f32.gmra.mrb[0].mxu0 %v505
        %v584 = vpop.f32.mrb[0].mxu0
        %v585 = vadd.f32 %v498, %v584
        %v586 = vpop.f32.mrb[0].mxu0
        %587 = vmatprep.mubr.f32.mxu0 0.0
        %588 = vmatmul.mubr.f32.gmra.mrb[0].mxu0 %v508
        %v589 = vpop.f32.mrb[0].mxu0
        %v590 = vadd.f32 %v498, %v589
        %v591 = vpop.f32.mrb[0].mxu0
        %592 = vmatprep.mubr.f32.mxu0 0.0
        %593 = vmatmul.mubr.f32.gmra.mrb[0].mxu0 %v511
        %v594 = vpop.f32.mrb[0].mxu0
        %v595 = vadd.f32 %v498, %v594
        %v596 = vpop.f32.mrb[0].mxu0
        %597 = vdwg.mxu0
        %v598 = vmax.f32 %v580, 0.0
        %v599 = vmax.f32 %v585, 0.0
        %v600 = vmax.f32 %v590, 0.0
        %v601 = vmax.f32 %v595, 0.0
        %v602 = vld [vmem:[#allocation10] sm:$0xff]
        %v603 = vld [vmem:[#allocation10 + $0x8] sm:$0xff]
        %v604 = vld [vmem:[#allocation10 + $0x10] sm:$0xff]
        %v605 = vld [vmem:[%s6] sm:$0x1]
        %v607 = vlaneseq
        %v608 = vshrl.u32 %v607, 7
        %v609 = vsub.s32 0, %v608
        %v610 = vrot.slane %v605, %v609
        %v613 = vsel %vm500, %v598, 0
        %v616 = vsel %vm500, %v599, 0
        %v619 = vsel %vm500, %v600, 0
        %v622 = vsel %vm500, %v601, 0
        %624 = vmatprep.subr.mxu0 0.0
        %625 = vmatpush1.msra.mxu0 %v602
        %626 = vmatprep.subr.mxu0 0.0
        %627 = vmatpush1.msra.mxu0 %v603
        %628 = vmatprep.subr.mxu0 0.0
        %629 = vmatpush1.msra.mxu0 %v604
        %630 = vmatprep.subr.mxu0 0.0
        %631 = vmatpush1.msra.mxu0 0.0
        %632 = vmatprep.subr.mxu0 0.0
        %633 = vmatpush1.msra.mxu0 0.0
        %634 = vmatprep.subr.mxu0 0.0
        %635 = vmatpush1.msra.mxu0 0.0
        %636 = vmatprep.subr.mxu0 0.0
        %637 = vmatpush1.msra.mxu0 0.0
        %638 = vmatprep.subr.mxu0 0.0
        %639 = vmatpush1.msra.mxu0 0.0
        %640 = vmatprep.subr.mxu0 0.0
        %641 = vmatpush1.msra.mxu0 0.0
        %642 = vmatprep.subr.mxu0 0.0
        %643 = vmatpush1.msra.mxu0 0.0
        %644 = vmatprep.subr.mxu0 0.0
        %645 = vmatpush1.msra.mxu0 0.0
        %646 = vmatprep.subr.mxu0 0.0
        %647 = vmatpush1.msra.mxu0 0.0
        %648 = vmatprep.subr.mxu0 0.0
        %649 = vmatpush1.msra.mxu0 0.0
        %650 = vmatprep.subr.mxu0 0.0
        %651 = vmatpush1.msra.mxu0 0.0
        %652 = vmatprep.subr.mxu0 0.0
        %653 = vmatpush1.msra.mxu0 0.0
        %654 = vmatprep.subr.mxu0 0.0
        %655 = vmatpush1.msra.mxu0 0.0
        %656 = vmatprep.subr.mxu0 0.0
        %657 = vmatpush1.msra.mxu0 0.0
        %658 = vmatprep.subr.mxu0 0.0
        %659 = vmatpush1.msra.mxu0 0.0
        %660 = vmatprep.subr.mxu0 0.0
        %661 = vmatpush1.msra.mxu0 0.0
        %662 = vmatprep.subr.mxu0 0.0
        %663 = vmatpush1.msra.mxu0 0.0
        %664 = vmatprep.subr.mxu0 0.0
        %665 = vmatpush1.msra.mxu0 0.0
        %666 = vmatprep.subr.mxu0 0.0
        %667 = vmatpush1.msra.mxu0 0.0
        %668 = vmatprep.subr.mxu0 0.0
        %669 = vmatpush1.msra.mxu0 0.0
        %670 = vmatprep.subr.mxu0 0.0
        %671 = vmatpush1.msra.mxu0 0.0
        %672 = vmatprep.subr.mxu0 0.0
        %673 = vmatpush1.msra.mxu0 0.0
        %674 = vmatprep.subr.mxu0 0.0
        %675 = vmatpush1.msra.mxu0 0.0
        %676 = vmatprep.subr.mxu0 0.0
        %677 = vmatpush1.msra.mxu0 0.0
        %678 = vmatprep.subr.mxu0 0.0
        %679 = vmatpush1.msra.mxu0 0.0
        %680 = vmatprep.subr.mxu0 0.0
        %681 = vmatpush1.msra.mxu0 0.0
        %682 = vmatprep.subr.mxu0 0.0
        %683 = vmatpush1.msra.mxu0 0.0
        %684 = vmatprep.subr.mxu0 0.0
        %685 = vmatpush1.msra.mxu0 0.0
        %686 = vmatprep.subr.mxu0 0.0
        %687 = vmatpush1.msra.mxu0 0.0
        %688 = vmatprep.mubr.f32.mxu0 0.0
        %689 = vmatmul.mubr.f32.gmra.mrb[0].mxu0 %v613
        %v690 = vpop.f32.mrb[0].mxu0
        %v691 = vadd.f32 %v610, %v690
        %v692 = vpop.f32.mrb[0].mxu0
        %693 = vmatprep.mubr.f32.mxu0 0.0
        %694 = vmatmul.mubr.f32.gmra.mrb[0].mxu0 %v616
        %v695 = vpop.f32.mrb[0].mxu0
        %v696 = vadd.f32 %v610, %v695
        %v697 = vpop.f32.mrb[0].mxu0
        %698 = vmatprep.mubr.f32.mxu0 0.0
        %699 = vmatmul.mubr.f32.gmra.mrb[0].mxu0 %v619
        %v700 = vpop.f32.mrb[0].mxu0
        %v701 = vadd.f32 %v610, %v700
        %v702 = vpop.f32.mrb[0].mxu0
        %703 = vmatprep.mubr.f32.mxu0 0.0
        %704 = vmatmul.mubr.f32.gmra.mrb[0].mxu0 %v622
        %v705 = vpop.f32.mrb[0].mxu0
        %v706 = vadd.f32 %v610, %v705
        %v707 = vpop.f32.mrb[0].mxu0
        %708 = vdwg.mxu0
        %vm709 = vcmask 138368
        %v710 = vsel %vm709, %v691, -inf
        %v711 = vsel %vm709, %v696, -inf
        %v712 = vsel %vm709, %v701, -inf
        %v713 = vsel %vm709, %v706, -inf
        %v714 = vmax.f32 %v710, %v711
        %v715 = vmax.f32 %v712, %v713
        %v716 = vmax.f32 %v714, %v715
        %v717 = vsub.f32 %v691, %v716
        %v718 = vsub.f32 %v696, %v716
        %v719 = vsub.f32 %v701, %v716
        %v720 = vsub.f32 %v706, %v716
        %v721 = vmul.f32 %v717, 1.442695
        %v722 = vpow.pop %v721
        %v723 = vmul.f32 %v718, 1.442695
        %v724 = vpow.pop %v723
        %v725 = vmul.f32 %v719, 1.442695
        %v726 = vpow.pop %v725
        %v727 = vmul.f32 %v720, 1.442695
        %v728 = vpow.pop %v727
        %v729 = vsel %vm709, %v722, 0.0
        %v730 = vsel %vm709, %v724, 0.0
        %v731 = vadd.f32 %v729, %v730
        %v732 = vsel %vm709, %v726, 0.0
        %v733 = vadd.f32 %v731, %v732
        %v734 = vsel %vm709, %v728, 0.0
        %v735 = vadd.f32 %v733, %v734
        %v736 = vrcp.pop %v735
        %v737 = vmul.f32 %v722, %v736
        %v738 = vmul.f32 %v724, %v736
        %v739 = vmul.f32 %v726, %v736
        %v740 = vmul.f32 %v728, %v736
        %742 = vset.pattern.permute.xlu0 16
        %743 = vperm.xlu0 %742, %v737
        %v744 = vpop.permute.xlu0 %743
        %747 = vset.pattern.permute.xlu0 16
        %748 = vperm.xlu0 %747, %v738
        %v749 = vpop.permute.xlu0 %748
        %752 = vset.pattern.permute.xlu0 16
        %753 = vperm.xlu0 %752, %v739
        %v754 = vpop.permute.xlu0 %753
        %757 = vset.pattern.permute.xlu0 16
        %758 = vperm.xlu0 %757, %v740
        %v759 = vpop.permute.xlu0 %758
        %v761 = vmul.f32 %v744, %v691
        %v762 = vmul.f32 %v749, %v696
        %v763 = vmul.f32 %v754, %v701
        %v764 = vmul.f32 %v759, %v706
        %v765 = vsel %vm380, %v761, 0.0
        %v766 = vsel %vm380, %v762, 0.0
        %v767 = vadd.f32 %v765, %v766
        %v768 = vsel %vm380, %v763, 0.0
        %v769 = vadd.f32 %v767, %v768
        %v770 = vsel %vm380, %v764, 0.0
        %v771 = vadd.f32 %v769, %v770
        %772 = vst.msk [vmem:[%s376] sm:$0xff] %vm380, %v771
        %s773 = sand.u32 %s193, 1
        %s774 = scalar_lea.sflag [#allocation4], %s773
        %s775 = sand.u32 %s193, 1
        %s776 = smul.addr %s775, 8
        %s777 = scalar_lea.vmem [#allocation11], %s776
        // Predicated region
        $region69: #{tpu_custom_call.1} parent=47 // pred_check
          %p778 = pneg %p203
        $region70: #{tpu_custom_call.1} parent=47 // pred_check_branch
          %780 = sbr.rel (%p778) target = $region72
        $region71: #{tpu_custom_call.1} parent=47 // pred_region
          %s782 = ssub.s32 128, 128
          %783 = vsyncadd %s774, %s782
          %s784 = smul.addr %s28, 128
          %s785 = scalar_lea.hbm %s7, %s784
          %s787 = sshll.u32 %s777, 4
          %s788 = int_to_ptr.vmem [resolvable:$true] %s787
          %790 = dma.vmem_to_hbm [thread:$0]  %s788, 128, %s785, %s774
        $region72: #{tpu_custom_call.1} parent=47 // pred_fallthru
          _
      $region48: #{tpu_custom_call.1} parent=5 // pred_fallthru
        _
      %p791 = scmp.le.s32.totalorder 2, %s23
      // Predicated region
      $region73: #{tpu_custom_call.1} parent=5 // pred_check
        %p792 = pneg %p791
      $region74: #{tpu_custom_call.1} parent=5 // pred_check_branch
        %794 = sbr.rel (%p792) target = $region76
      $region75: #{tpu_custom_call.1} parent=5 // pred_region
        %s795 = ssub.s32 %s23, 2
        // Predicated region
        $region77: #{tpu_custom_call.1} parent=75 // pred_check
          %p796 = pneg %p209
        $region78: #{tpu_custom_call.1} parent=75 // pred_check_branch
          %798 = sbr.rel (%p796) target = $region80
        $region79: #{tpu_custom_call.1} parent=75 // pred_region
          %s799 = sand.u32 %s194, 1
          %s800 = scalar_lea.sflag [#allocation4], %s799
          %s801 = sand.u32 %s194, 1
          %s802 = smul.addr %s801, 8
          %s803 = scalar_lea.vmem [#allocation11], %s802
          %804 = dma.done %s800, 128
        $region80: #{tpu_custom_call.1} parent=75 // pred_fallthru
          _
      $region76: #{tpu_custom_call.1} parent=5 // pred_fallthru
        _
    $region6: #{tpu_custom_call.1} parent=1 // loop_footer
      %s27 = sadd.s32 1, %s23
    $region7: #{tpu_custom_call.1} parent=1 // loop_footer_branch
      %22 = sbr.rel target = $region3
    $region8: #{tpu_custom_call.1} parent=1 // loop_exit
      _
    %805 = vsyncpa [#allocation3], 1
    %s806 = scalar_lea.sflag [#allocation3], 1
    %807 = vsyncpa %s806, 1
    %808 = vsyncpa [#allocation6], 1
    %s809 = scalar_lea.sflag [#allocation6], 1
    %810 = vsyncpa %s809, 1
    %811 = vsyncpa [#allocation9], 1
    %812 = vsyncpa [#allocation4], 1
    %s813 = scalar_lea.sflag [#allocation4], 1
    %814 = vsyncpa %s813, 1

</llo_original>
